<compile_context>
chip_gen: v7x
topology: tpu7x:2x2x1
jax: 0.10.0
libtpu: 0.0.40
codegen_flags: <defaults>
</compile_context>

<pallas_src>
import functools
import math

import jax
import jax.numpy as jnp
from jax.experimental import pallas as pl
from jax.experimental.pallas import tpu as pltpu


# --------------------------------------------------------------------------- #
# Buffer construction (mirrors nn.Module.__init__)
# --------------------------------------------------------------------------- #
def build_positional_encoding(embedding_dim: int, max_len: int = 200,
                              dtype=jnp.float32) -> jnp.ndarray:
    """Returns pe of shape (max_len, embedding_dim); the torch buffer's size-1
    batch dim is pure broadcast, so it is kept 2-D and broadcast at use-site."""
    assert embedding_dim % 2 == 0, "embedding_dim must be even (matches torch)"
    position = jnp.arange(max_len, dtype=jnp.float32)[:, None]               # (max_len, 1)
    div_term = jnp.exp(
        jnp.arange(0, embedding_dim, 2, dtype=jnp.float32)
        * (-math.log(10000.0) / embedding_dim)
    )                                                                        # (D//2,)
    angles = position * div_term                                             # (max_len, D//2)
    pe = jnp.zeros((max_len, embedding_dim), dtype=jnp.float32)
    pe = pe.at[:, 0::2].set(jnp.sin(angles))
    pe = pe.at[:, 1::2].set(jnp.cos(angles))
    return pe.astype(dtype)


# --------------------------------------------------------------------------- #
# Kernels
# --------------------------------------------------------------------------- #
def _add_pe_kernel_3d(x_ref, pe_ref, o_ref):
    # x_ref / o_ref: (ts, B, D) with D % 128 == 0 and B % 8 == 0.
    # pe_ref: (ts, D) -> broadcast over the batch (sublane) axis, pure VPU add.
    o_ref[...] = x_ref[...] + pe_ref[...][:, None, :]


def _add_pe_kernel_fold(x_ref, pe_ref, o_ref, *, batch):
    # x_ref / o_ref: (ts, B*D); pe_ref: (ts, D).
    # Replicate pe across the batch *in-kernel* (lane-aligned vreg copies when
    # D % 128 == 0) instead of streaming a B-times duplicated pe from HBM.
    pe_rows = pe_ref[...]
    if batch > 1:
        pe_rows = jnp.tile(pe_rows, (1, batch))
    o_ref[...] = x_ref[...] + pe_rows


# --------------------------------------------------------------------------- #
# Generation-aware tiling
# --------------------------------------------------------------------------- #
def _tpu_generation() -> str:
    try:
        kind = jax.devices()[0].device_kind.lower()
    except Exception:  # pragma: no cover - defensive
        return "unknown"
    if "v5" in kind:
        return "v5e"
    if "v6" in kind:
        return "v6e"
    if "v7" in kind or "7x" in kind:
        return "v7x"
    return "unknown"


# per-buffer target tile bytes, vmem_limit_bytes (None = compiler default),
# minimum grid steps (keeps the parallel seq axis splittable across v7x's 2 TCs).
_GEN_PARAMS = {
    "v5e":     (2 * 1024 * 1024, None,     1),
    "v6e":     (4 * 1024 * 1024, 64 << 20, 1),
    "v7x":     (6 * 1024 * 1024, 48 << 20, 4),
    "unknown": (2 * 1024 * 1024, None,     1),
}


def _round_up(n: int, m: int) -> int:
    return ((n + m - 1) // m) * m


def _choose_tile_s(seq_len: int, row_bytes: int, target_bytes: int,
                   min_steps: int) -> int:
    """Rows per block so one (x or out) buffer is ~target_bytes; sublane-aligned
    (multiple of 8) or the full seq extent. row_bytes must be the *padded* row size."""
    rows = max(8, target_bytes // max(1, row_bytes))
    if min_steps > 1:
        rows = min(rows, max(8, _round_up(pl.cdiv(seq_len, min_steps), 8)))
    if rows >= seq_len:
        return seq_len                      # full extent: always a legal block dim
    return max(8, (rows // 8) * 8)          # sublane-aligned


# --------------------------------------------------------------------------- #
# Forward
# --------------------------------------------------------------------------- #
def positional_encoding_forward(x: jnp.ndarray, pe: jnp.ndarray, *,
                                tile_s: int | None = None,
                                donate_x: bool = False) -> jnp.ndarray:
    """x: (seq_len, batch, embedding_dim); pe: (max_len, embedding_dim)."""
    S, B, D = x.shape
    max_len, D_pe = pe.shape
    assert D == D_pe, f"embedding_dim mismatch: x has {D}, pe has {D_pe}"
    assert S <= max_len, f"seq_len {S} exceeds positional-encoding max_len {max_len}"

    # pe is expected to be pre-built in x.dtype (build_positional_encoding(..., dtype=x.dtype));
    # the cast below only fires on a dtype mismatch.  (Deviates from PyTorch's
    # f32 promotion for bf16/fp16 inputs -- see header note.)
    pe_slice = pe[:S]
    if pe_slice.dtype != x.dtype:
        pe_slice = pe_slice.astype(x.dtype)

    itemsize = jnp.dtype(x.dtype).itemsize
    target_bytes, vmem_limit, min_steps = _GEN_PARAMS[_tpu_generation()]
    cparams = pltpu.CompilerParams(
        dimension_semantics=("parallel",),
        vmem_limit_bytes=vmem_limit,
    )
    io_alias = {0: 0} if donate_x else {}

    # 3-D path only when the batch is sublane-aligned: with B on the second-minor
    # axis Mosaic pads it to 8, so small batches would waste up to 8/B of every
    # vreg and buffer -- those cases take the lane-fold path below instead.
    lane_dense_3d = (D % 128 == 0) and (B % 8 == 0)
    if lane_dense_3d:
        row_bytes = _round_up(B, 8) * D * itemsize          # padded row accounting
        ts = tile_s if tile_s is not None else _choose_tile_s(
            S, row_bytes, target_bytes, min_steps)
        grid = (pl.cdiv(S, ts),)
        return pl.pallas_call(
            _add_pe_kernel_3d,
            out_shape=jax.ShapeDtypeStruct((S, B, D), x.dtype),
            grid=grid,
            in_specs=[
                pl.BlockSpec((ts, B, D), lambda i: (i, 0, 0)),
                pl.BlockSpec((ts, D), lambda i: (i, 0)),
            ],
            out_specs=pl.BlockSpec((ts, B, D), lambda i: (i, 0, 0)),
            compiler_params=cparams,
            input_output_aliases=io_alias,
        )(x, pe_slice)

    # Fold path: batch folded into the lane axis so output stores are width B*D
    # (lane-dense / minimally masked); pe streams un-duplicated as (ts, D) blocks
    # and is replicated across the batch inside the kernel.
    L = B * D
    x2 = x.reshape(S, L)                                    # layout-preserving
    row_bytes = L * itemsize
    ts = tile_s if tile_s is not None else _choose_tile_s(
        S, row_bytes, target_bytes, min_steps)
    grid = (pl.cdiv(S, ts),)
    out2 = pl.pallas_call(
        functools.partial(_add_pe_kernel_fold, batch=B),
        out_shape=jax.ShapeDtypeStruct((S, L), x.dtype),
        grid=grid,
        in_specs=[
            pl.BlockSpec((ts, L), lambda i: (i, 0)),
            pl.BlockSpec((ts, D), lambda i: (i, 0)),
        ],
        out_specs=pl.BlockSpec((ts, L), lambda i: (i, 0)),
        compiler_params=cparams,
        input_output_aliases=io_alias,
    )(x2, pe_slice)
    return out2.reshape(S, B, D)


if __name__ == "__main__":
    MAX_LEN = 200

    # 1) Primary small demo, module-consistent shapes (seq-first), auto tiling.
    SEQ, BATCH, EMB_DIM = 8, 2, 32
    key = jax.random.PRNGKey(0)
    x = jax.random.normal(key, (SEQ, BATCH, EMB_DIM), dtype=jnp.float32)
    pe = build_positional_encoding(EMB_DIM, MAX_LEN, dtype=x.dtype)
    out = jax.block_until_ready(positional_encoding_forward(x, pe))
    ref = x + pe[:SEQ][:, None, :]
    assert out.shape == (SEQ, BATCH, EMB_DIM)
    assert jnp.allclose(out, ref, atol=1e-6, rtol=1e-6)

    # 2) Fold path (small D) with a pipelined grid (grid > 1), in-kernel pe tile.
    S2 = 24
    x_b = jax.random.normal(jax.random.PRNGKey(0), (S2, BATCH, EMB_DIM), jnp.float32)
    out_b = jax.block_until_ready(positional_encoding_forward(x_b, pe, tile_s=8))
    ref_b = x_b + pe[:S2][:, None, :]
    assert jnp.allclose(out_b, ref_b, atol=1e-6, rtol=1e-6)

    # 3) Lane-dense 3-D path (D % 128 == 0, B % 8 == 0) with a pipelined grid.
    S3, B3, D3 = 32, 8, 128
    x_c = jax.random.normal(jax.random.PRNGKey(0), (S3, B3, D3), jnp.float32)
    pe_c = build_positional_encoding(D3, MAX_LEN, dtype=x_c.dtype)
    out_c = jax.block_until_ready(positional_encoding_forward(x_c, pe_c, tile_s=8))
    ref_c = x_c + pe_c[:S3][:, None, :]
    assert jnp.allclose(out_c, ref_c, atol=1e-6, rtol=1e-6)

    # 4) D % 128 == 0 but small batch (B=2): falls through to the fold path with
    #    lane-aligned in-kernel replication (no sublane-padding waste).
    S4, B4, D4 = 16, 2, 128
    x_d = jax.random.normal(jax.random.PRNGKey(0), (S4, B4, D4), jnp.float32)
    out_d = jax.block_until_ready(positional_encoding_forward(x_d, pe_c, tile_s=8))
    ref_d = x_d + pe_c[:S4][:, None, :]
    assert jnp.allclose(out_d, ref_d, atol=1e-6, rtol=1e-6)

    print("KERNEL_OK")
</pallas_src>

<mosaic_0001>
module attributes {stable_mosaic.version = 11 : i64} {
  func.func @_add_pe_kernel_fold(%arg0: i32, %arg1: memref<8x64xf32, #tpu.memory_space<vmem>>, %arg2: memref<8x32xf32, #tpu.memory_space<vmem>>, %arg3: memref<8x64xf32, #tpu.memory_space<vmem>>) attributes {dimension_semantics = [#tpu.dimension_semantics<parallel>], iteration_bounds = array<i64: 1>, scalar_prefetch = 0 : i64, scratch_operands = 0 : i64, tpu.core_type = #tpu.core_type<tc>, window_params = [{transform_indices = @transform_0, window_bounds = array<i64: 8, 64>}, {transform_indices = @transform_1, window_bounds = array<i64: 8, 32>}, {transform_indices = @transform_2, window_bounds = array<i64: 8, 64>}]} {
    %c0 = arith.constant 0 : index
    %c0_0 = arith.constant 0 : index
    %0 = vector.load %arg2[%c0, %c0_0] : memref<8x32xf32, #tpu.memory_space<vmem>>, vector<8x32xf32>
    %1 = tpu.concatenate %0, %0 in 1 : vector<8x32xf32>, vector<8x32xf32> -> vector<8x64xf32>
    %c0_1 = arith.constant 0 : index
    %c0_2 = arith.constant 0 : index
    %2 = vector.load %arg1[%c0_1, %c0_2] : memref<8x64xf32, #tpu.memory_space<vmem>>, vector<8x64xf32>
    %3 = arith.addf %2, %1 : vector<8x64xf32>
    %c0_3 = arith.constant 0 : index
    %c0_4 = arith.constant 0 : index
    %4 = vector.load %arg3[%c0_3, %c0_4] : memref<8x64xf32, #tpu.memory_space<vmem>>, vector<8x64xf32>
    tpu.vector_store %arg3[%c0_3, %c0_4], %3 {strides = array<i32>} : memref<8x64xf32, #tpu.memory_space<vmem>>, vector<8x64xf32>,
    return
  }
  func.func @transform_0(%arg0: i32) -> (i32, i32) {
    %c0_i32 = arith.constant 0 : i32
    %c0_i32_0 = arith.constant 0 : i32
    return %arg0, %c0_i32 : i32, i32
  }
  func.func @transform_1(%arg0: i32) -> (i32, i32) {
    %c0_i32 = arith.constant 0 : i32
    %c0_i32_0 = arith.constant 0 : i32
    return %arg0, %c0_i32 : i32, i32
  }
  func.func @transform_2(%arg0: i32) -> (i32, i32) {
    %c0_i32 = arith.constant 0 : i32
    %c0_i32_0 = arith.constant 0 : i32
    return %arg0, %c0_i32 : i32, i32
  }
}

</mosaic_0001>

<llo_original>
// kernel: tpu_custom_call.1
$region0: #{tpu_custom_call.1}
  #allocation0 [shape = 'u32[]', space=smem, size = 0x4, offset = 0x4, fixed_abs, tag = 'smem constant byte address 0x4 - core index']
  #allocation1 [shape = 'u32[144,128]{1,0:T(1,128)}', space=vmem, size = 0x12000, scoped, tag = 'internal scratch']
  %s0 = inlined_call_operand.hbm [shape: f32[8,64], index: 0, kind: input, shape index: {}]
  %s1 = inlined_call_operand.hbm [shape: f32[8,32], index: 1, kind: input, shape index: {}]
  %s2 = inlined_call_operand.hbm [shape: f32[8,64], index: 2, kind: output, shape index: {}]
  %s3 = sld [smem:[#allocation0]]
  $region26: #{tpu_custom_call.1} parent=0
    _
  %s5 = ssub.s32 1, %s3
  %s6 = scalar_select 0, %s5, %s3
  $region1: #{tpu_custom_call.1} parent=0
    #allocation2 [shape = 'u8[4096]{0}', space=vmem, size = 0x1000, scoped, tag = 'input window, operand 0, single buffered']
    #allocation3 [shape = 's32[1]{0}', space=sflag, size = 0x4, scoped, tag = 'scoped memory for tpu_custom_call.1']
    #allocation4 [shape = 's32[1]{0}', space=sflag, size = 0x4, scoped, tag = 'scoped memory for tpu_custom_call.1']
    #allocation5 [shape = 'u8[4096]{0}', space=vmem, size = 0x1000, scoped, tag = 'input window, operand 1, single buffered']
    #allocation6 [shape = 's32[1]{0}', space=sflag, size = 0x4, scoped, tag = 'scoped memory for tpu_custom_call.1']
    #allocation7 [shape = 'u8[4096]{0}', space=vmem, size = 0x1000, scoped, tag = 'output window, operand 0, single buffered']
    %7 = vsyncpa [#allocation3], 0
    %8 = vsyncpa [#allocation6], 0
    %9 = vsyncpa [#allocation4], 0
    // Predicated region
    $region2: #{tpu_custom_call.1} parent=1 // pred_check
      _
    $region3: #{tpu_custom_call.1} parent=1 // pred_check_branch
      %11 = sbr.rel (0) target = $region5
    $region4: #{tpu_custom_call.1} parent=1 // pred_region
      %s13 = ssub.s32 128, 128
      %14 = vsyncadd [#allocation3], %s13
      %s16 = sshll.u32 [#allocation2], 4
      %s17 = int_to_ptr.vmem [resolvable:$true] %s16
      %19 = dma.hbm_to_vmem [thread:$0]  %s0, 128, %s17, [#allocation3]
    $region5: #{tpu_custom_call.1} parent=1 // pred_fallthru
      _
    // Predicated region
    $region6: #{tpu_custom_call.1} parent=1 // pred_check
      _
    $region7: #{tpu_custom_call.1} parent=1 // pred_check_branch
      %21 = sbr.rel (0) target = $region9
    $region8: #{tpu_custom_call.1} parent=1 // pred_region
      %s23 = ssub.s32 128, 128
      %24 = vsyncadd [#allocation6], %s23
      %s26 = sshll.u32 [#allocation5], 4
      %s27 = int_to_ptr.vmem [resolvable:$true] %s26
      %29 = dma.hbm_to_vmem [thread:$0]  %s1, 128, %s27, [#allocation6]
    $region9: #{tpu_custom_call.1} parent=1 // pred_fallthru
      _
    // Predicated region
    $region10: #{tpu_custom_call.1} parent=1 // pred_check
      _
    $region11: #{tpu_custom_call.1} parent=1 // pred_check_branch
      %31 = sbr.rel (0) target = $region13
    $region12: #{tpu_custom_call.1} parent=1 // pred_region
      %32 = dma.done [#allocation3], 128
    $region13: #{tpu_custom_call.1} parent=1 // pred_fallthru
      _
    // Predicated region
    $region14: #{tpu_custom_call.1} parent=1 // pred_check
      _
    $region15: #{tpu_custom_call.1} parent=1 // pred_check_branch
      %34 = sbr.rel (0) target = $region17
    $region16: #{tpu_custom_call.1} parent=1 // pred_region
      %35 = dma.done [#allocation6], 128
    $region17: #{tpu_custom_call.1} parent=1 // pred_fallthru
      _
    %v36 = vld [vmem:[#allocation5] sm:$0xff]
    %38 = vrot.lane.b32.xlu0 %v36, 32
    %v39 = vpop.permute.xlu0 %38
    %vm41 = vcmask 261120
    %v42 = vsel %vm41, %v36, %v39
    %v43 = vld [vmem:[#allocation2] sm:$0xff]
    %v44 = vadd.f32 %v43, %v42
    %vm45 = vcmask 523264
    %46 = vst.msk [vmem:[#allocation7] sm:$0xff] %vm45, %v44
    // Predicated region
    $region18: #{tpu_custom_call.1} parent=1 // pred_check
      _
    $region19: #{tpu_custom_call.1} parent=1 // pred_check_branch
      %48 = sbr.rel (0) target = $region21
    $region20: #{tpu_custom_call.1} parent=1 // pred_region
      %s50 = ssub.s32 128, 128
      %51 = vsyncadd [#allocation4], %s50
      %s53 = sshll.u32 [#allocation7], 4
      %s54 = int_to_ptr.vmem [resolvable:$true] %s53
      %56 = dma.vmem_to_hbm [thread:$0]  %s54, 128, %s2, [#allocation4]
    $region21: #{tpu_custom_call.1} parent=1 // pred_fallthru
      _
    // Predicated region
    $region22: #{tpu_custom_call.1} parent=1 // pred_check
      _
    $region23: #{tpu_custom_call.1} parent=1 // pred_check_branch
      %58 = sbr.rel (0) target = $region25
    $region24: #{tpu_custom_call.1} parent=1 // pred_region
      %59 = dma.done [#allocation4], 128
    $region25: #{tpu_custom_call.1} parent=1 // pred_fallthru
      _
    %60 = vsyncpa [#allocation3], 1
    %61 = vsyncpa [#allocation6], 1
    %62 = vsyncpa [#allocation4], 1

</llo_original>
